<compile_context>
chip_gen: v6e
topology: v6e:2x2x1
jax: 0.10.0
libtpu: 0.0.40
codegen_flags: <defaults>
</compile_context>

<pallas_src>
import numpy as np

import jax
import jax.numpy as jnp
from jax.experimental import pallas as pl
from jax.experimental.pallas import tpu as pltpu


def _make_sepconv_kernel(*, A, left_need, HWin, HWout, KH, KW, Wout,
                         col_has_mask):
    """Builds the kernel body with all geometry baked in as Python constants."""
    f32 = jnp.float32

    def kernel(x_ref, dw_ref, cmask_ref, wbd_ref, o_ref, xpad_ref):
        # x_ref    : (ROWS, HWin)    raw flattened row streams of one image group
        # dw_ref   : (T, ROWS, 1)    depthwise tap weight per packed row
        # cmask_ref: (KW, HWout)     width-edge validity masks per horizontal tap
        # wbd_ref  : (G*Cout, ROWS)  block-diagonal pointwise (1x1) weight
        # o_ref    : (G*Cout, HWout) group output, NCHW-flat, lane-dense
        # xpad_ref : (ROWS, Lpad)    scratch: zero margins + interior copy

        # Build the zero-margined padded stream in VMEM (feedback #1: no HBM
        # pad).  Zeroing the whole scratch keeps every store fully aligned and
        # makes each grid step self-contained (safe under "parallel" sharding);
        # only the two margins strictly need it (a few KB, negligible).
        xpad_ref[...] = jnp.zeros(xpad_ref.shape, f32)
        xpad_ref[:, A:A + HWin] = x_ref[...].astype(f32)

        base = A - left_need
        acc = None
        for kw in range(KW):
            # Sum the KH vertical taps of this horizontal offset first so the
            # width-edge mask is applied once per kw instead of once per tap.
            part = None
            for kh in range(KH):
                t = kh * KW + kw
                s = base + kh * Wout + kw
                # Unaligned lane-offset slice -> XLU rotate; fine at this size
                # (see TODO above for the Wout >= 128 layout).
                tap = xpad_ref[:, s:s + HWout] * dw_ref[t]
                part = tap if part is None else part + tap
            if col_has_mask[kw]:
                part = part * cmask_ref[kw:kw + 1]
            acc = part if acc is None else acc + part

        # Pointwise 1x1 conv for the whole packed group as ONE MXU matmul with
        # a block-diagonal weight; result rows are already in NCHW order.
        o_ref[...] = jnp.dot(wbd_ref[...], acc,
                             preferred_element_type=f32).astype(o_ref.dtype)

    return kernel


def make_separable_conv2d(dw_weight, pw_weight, *, padding=0):
    """Builds the forward fn for SeparableConv2d (stride=1, dilation=1, no bias).

    dw_weight: (Cin, 1, KH, KW)   PyTorch depthwise conv weight
    pw_weight: (Cout, Cin, 1, 1)  PyTorch pointwise conv weight
    Returns forward(x_nchw: (N, Cin, H, W)) -> (N, Cout, Hout, Wout).
    """
    Cin = int(dw_weight.shape[0])
    KH, KW = int(dw_weight.shape[2]), int(dw_weight.shape[3])
    Cout = int(pw_weight.shape[0])
    P = int(padding)
    T = KH * KW
    f32 = jnp.float32

    # ---- weight-side preprocessing: done ONCE per weight set (feedback #11) ----
    dw = jnp.asarray(dw_weight, f32)[:, 0, :, :]                    # (Cin, KH, KW)
    pw = jnp.asarray(pw_weight, f32)[:, :, 0, 0]                    # (Cout, Cin)

    # Pack G images per grid step so the depthwise phase fills 8 f32 sublanes
    # (Cin=4 alone leaves every vreg half empty) and the batch collapses into
    # as few grid steps as possible (feedback #2/#5).
    G = max(1, 8 // Cin)
    ROWS = G * Cin

    dw_taps = jnp.transpose(dw, (1, 2, 0)).reshape(T, Cin)          # (T, Cin)
    dw_rows = jnp.tile(dw_taps, (1, G))[:, :, None]                 # (T, ROWS, 1)
    # Block-diagonal pointwise weight: one (G*Cout, G*Cin) matmul per group.
    wbd = jnp.kron(jnp.eye(G, dtype=f32), pw)                       # (G*Cout, ROWS)

    @jax.jit
    def forward(x_nchw):
        N, C, H, W = x_nchw.shape
        if C != Cin:
            raise ValueError("channel mismatch")
        Hout = H + 2 * P - KH + 1
        Wout = W + 2 * P - KW + 1
        if Wout != W:
            # TODO(synk): widths with 2*padding != KW-1 (and stride/dilation
            # != 1) need a different flattening; the benchmark module only
            # instantiates 'same'-style separable convs (and the 1x1 default).
            raise NotImplementedError(
                "separable_conv2d requires 2*padding == kernel_w - 1")
        HWin, HWout = H * W, Hout * Wout

        # Flat-stream geometry: with row stride == Wout, depthwise tap (kh, kw)
        # is a uniform lane shift of kh*Wout + kw on a stream with `left_need`
        # leading zeros.  Margins live only in the VMEM scratch.
        left_need = P * Wout + P
        right_need = P * Wout + max(0, KW - 1 - P)
        A = -(-left_need // 128) * 128        # lane-aligned interior offset
        Lpad = A + HWin + right_need

        # Width-edge validity masks: numpy at trace time -> baked constants
        # (zero per-call XLA ops).
        cols = np.arange(HWout, dtype=np.int64) % Wout
        shift = cols[None, :] + np.arange(KW, dtype=np.int64)[:, None] - P
        cmask_np = ((shift >= 0) & (shift < W)).astype(np.float32)  # (KW, HWout)
        col_has_mask = tuple(bool((cmask_np[kw] != 1.0).any())
                             for kw in range(KW))
        cmask = jnp.asarray(cmask_np)

        # Group the batch: (N, Cin, H, W) -> (num_groups, G*Cin, H*W).
        # Free reshapes; a tiny batch pad only when N % G != 0.
        Npad = -(-N // G) * G
        xg = x_nchw
        if Npad != N:
            xg = jnp.pad(xg, ((0, Npad - N), (0, 0), (0, 0), (0, 0)))
        num_groups = Npad // G
        xg = xg.reshape(num_groups, ROWS, HWin)

        kernel = _make_sepconv_kernel(
            A=A, left_need=left_need, HWin=HWin, HWout=HWout,
            KH=KH, KW=KW, Wout=Wout, col_has_mask=col_has_mask)

        itemsize = jnp.dtype(x_nchw.dtype).itemsize
        bytes_accessed = (itemsize * (Npad * Cin * HWin + Npad * Cout * HWout)
                          + 4 * (T * ROWS + G * Cout * ROWS + KW * HWout))
        flops = 2 * Npad * HWout * Cin * (T + Cout)

        out_flat = pl.pallas_call(
            kernel,
            out_shape=jax.ShapeDtypeStruct((Npad * Cout, HWout), x_nchw.dtype),
            grid_spec=pltpu.PrefetchScalarGridSpec(
                num_scalar_prefetch=0,
                grid=(num_groups,),
                in_specs=[
                    pl.BlockSpec((None, ROWS, HWin), lambda g: (g, 0, 0)),
                    pl.BlockSpec((T, ROWS, 1), lambda g: (0, 0, 0)),
                    pl.BlockSpec((KW, HWout), lambda g: (0, 0)),
                    pl.BlockSpec((G * Cout, ROWS), lambda g: (0, 0)),
                ],
                out_specs=pl.BlockSpec((G * Cout, HWout), lambda g: (g, 0)),
                scratch_shapes=[pltpu.VMEM((ROWS, Lpad), f32)],
            ),
            compiler_params=pltpu.CompilerParams(
                dimension_semantics=("parallel",)),
            cost_estimate=pl.CostEstimate(flops=flops, transcendentals=0,
                                          bytes_accessed=bytes_accessed),
        )(xg, dw_rows, cmask, wbd)

        # (Npad*Cout, Hout*Wout) is NCHW-contiguous; reshape is free.
        out = out_flat.reshape(Npad, Cout, Hout, Wout)
        return out[:N] if Npad != N else out

    return forward


def _reference(x_nchw, dw_weight, pw_weight, padding):
    # Pure-numpy reference of the PyTorch forward (stride=1, dilation=1, no bias).
    x = np.asarray(x_nchw, np.float32)
    dw = np.asarray(dw_weight, np.float32)
    pw = np.asarray(pw_weight, np.float32)
    N, Cin, H, W = x.shape
    KH, KW = dw.shape[2], dw.shape[3]
    xp = np.pad(x, ((0, 0), (0, 0), (padding, padding), (padding, padding)))
    Hout = H + 2 * padding - KH + 1
    Wout = W + 2 * padding - KW + 1
    dwc = np.zeros((N, Cin, Hout, Wout), np.float32)
    for kh in range(KH):
        for kw in range(KW):
            dwc += xp[:, :, kh:kh + Hout, kw:kw + Wout] \
                * dw[None, :, 0, kh, kw][..., None, None]
    return np.einsum('nchw,oc->nohw', dwc, pw[:, :, 0, 0])


if __name__ == "__main__":
    key = jax.random.PRNGKey(0)

    def run_case(N, Cin, Cout, H, W, K, PAD, case_key):
        kx, kdw, kpw = jax.random.split(case_key, 3)
        x = jax.random.normal(kx, (N, Cin, H, W), dtype=jnp.float32)
        dw_weight = jax.random.normal(kdw, (Cin, 1, K, K), dtype=jnp.float32) * 0.1
        pw_weight = jax.random.normal(kpw, (Cout, Cin, 1, 1), dtype=jnp.float32) * 0.1
        fwd = make_separable_conv2d(dw_weight, pw_weight, padding=PAD)
        out = jax.block_until_ready(fwd(x))
        ref = _reference(x, dw_weight, pw_weight, PAD)
        np.testing.assert_allclose(np.asarray(out), ref, rtol=1e-4, atol=1e-4)

    k1, k2, k3 = jax.random.split(key, 3)
    # Primary config consistent with the module: 3x3 depthwise, padding=1.
    run_case(2, 4, 8, 16, 16, 3, 1, k1)
    # Review-requested robustness checks: 5x5 'same' and the 1x1 module default.
    run_case(2, 4, 8, 16, 16, 5, 2, k2)
    run_case(2, 4, 8, 16, 16, 1, 0, k3)
    print("KERNEL_OK")
</pallas_src>

<mosaic_0001>
module attributes {stable_mosaic.version = 11 : i64} {
  func.func @kernel(%arg0: i32, %arg1: memref<1x8x256xf32, #tpu.memory_space<vmem>>, %arg2: memref<9x8x1xf32, #tpu.memory_space<vmem>>, %arg3: memref<3x256xf32, #tpu.memory_space<vmem>>, %arg4: memref<16x8xf32, #tpu.memory_space<vmem>>, %arg5: memref<16x256xf32, #tpu.memory_space<vmem>>, %arg6: memref<8x401xf32, #tpu.memory_space<vmem>>) attributes {dimension_semantics = [#tpu.dimension_semantics<parallel>], iteration_bounds = array<i64: 1>, scalar_prefetch = 0 : i64, scratch_operands = 1 : i64, tpu.core_type = #tpu.core_type<tc>, window_params = [{transform_indices = @transform_0, window_bounds = array<i64: 1, 8, 256>}, {pipeline_mode = #tpu.pipeline_mode<synchronous>, transform_indices = @transform_1, window_bounds = array<i64: 9, 8, 1>}, {pipeline_mode = #tpu.pipeline_mode<synchronous>, transform_indices = @transform_2, window_bounds = array<i64: 3, 256>}, {pipeline_mode = #tpu.pipeline_mode<synchronous>, transform_indices = @transform_3, window_bounds = array<i64: 16, 8>}, {transform_indices = @transform_4, window_bounds = array<i64: 16, 256>}]} {
    %cst = arith.constant 0.000000e+00 : f32
    %0 = vector.broadcast %cst : f32 to vector<8x401xf32>
    %c0 = arith.constant 0 : index
    %c0_0 = arith.constant 0 : index
    %1 = vector.load %arg6[%c0, %c0_0] : memref<8x401xf32, #tpu.memory_space<vmem>>, vector<8x401xf32>
    tpu.vector_store %arg6[%c0, %c0_0], %0 {strides = array<i32>} : memref<8x401xf32, #tpu.memory_space<vmem>>, vector<8x401xf32>,
    %c0_1 = arith.constant 0 : index
    %c0_2 = arith.constant 0 : index
    %c0_3 = arith.constant 0 : index
    %2 = vector.load %arg1[%c0_1, %c0_2, %c0_3] : memref<1x8x256xf32, #tpu.memory_space<vmem>>, vector<1x8x256xf32>
    %3 = vector.shape_cast %2 : vector<1x8x256xf32> to vector<8x256xf32>
    %c0_4 = arith.constant 0 : index
    %c128 = arith.constant 128 : index
    %4 = vector.load %arg6[%c0_4, %c128] : memref<8x401xf32, #tpu.memory_space<vmem>>, vector<8x256xf32>
    tpu.vector_store %arg6[%c0_4, %c128], %3 {strides = array<i32>} : memref<8x401xf32, #tpu.memory_space<vmem>>, vector<8x256xf32>,
    %c0_5 = arith.constant 0 : index
    %c111 = arith.constant 111 : index
    %5 = vector.load %arg6[%c0_5, %c111] : memref<8x401xf32, #tpu.memory_space<vmem>>, vector<8x256xf32>
    %c0_6 = arith.constant 0 : index
    %c0_7 = arith.constant 0 : index
    %c0_8 = arith.constant 0 : index
    %6 = vector.load %arg2[%c0_6, %c0_7, %c0_8] : memref<9x8x1xf32, #tpu.memory_space<vmem>>, vector<1x8x1xf32>
    %7 = vector.shape_cast %6 : vector<1x8x1xf32> to vector<8x1xf32>
    %8 = vector.broadcast %7 : vector<8x1xf32> to vector<8x256xf32>
    %9 = arith.mulf %5, %8 : vector<8x256xf32>
    %c0_9 = arith.constant 0 : index
    %c127 = arith.constant 127 : index
    %10 = vector.load %arg6[%c0_9, %c127] : memref<8x401xf32, #tpu.memory_space<vmem>>, vector<8x256xf32>
    %c3 = arith.constant 3 : index
    %c0_10 = arith.constant 0 : index
    %c0_11 = arith.constant 0 : index
    %11 = vector.load %arg2[%c3, %c0_10, %c0_11] : memref<9x8x1xf32, #tpu.memory_space<vmem>>, vector<1x8x1xf32>
    %12 = vector.shape_cast %11 : vector<1x8x1xf32> to vector<8x1xf32>
    %13 = vector.broadcast %12 : vector<8x1xf32> to vector<8x256xf32>
    %14 = arith.mulf %10, %13 : vector<8x256xf32>
    %15 = arith.addf %9, %14 : vector<8x256xf32>
    %c0_12 = arith.constant 0 : index
    %c143 = arith.constant 143 : index
    %16 = vector.load %arg6[%c0_12, %c143] : memref<8x401xf32, #tpu.memory_space<vmem>>, vector<8x256xf32>
    %c6 = arith.constant 6 : index
    %c0_13 = arith.constant 0 : index
    %c0_14 = arith.constant 0 : index
    %17 = vector.load %arg2[%c6, %c0_13, %c0_14] : memref<9x8x1xf32, #tpu.memory_space<vmem>>, vector<1x8x1xf32>
    %18 = vector.shape_cast %17 : vector<1x8x1xf32> to vector<8x1xf32>
    %19 = vector.broadcast %18 : vector<8x1xf32> to vector<8x256xf32>
    %20 = arith.mulf %16, %19 : vector<8x256xf32>
    %21 = arith.addf %15, %20 : vector<8x256xf32>
    %c0_15 = arith.constant 0 : index
    %c0_16 = arith.constant 0 : index
    %22 = vector.load %arg3[%c0_15, %c0_16] : memref<3x256xf32, #tpu.memory_space<vmem>>, vector<1x256xf32>
    %23 = vector.broadcast %22 : vector<1x256xf32> to vector<8x256xf32>
    %24 = arith.mulf %21, %23 : vector<8x256xf32>
    %c0_17 = arith.constant 0 : index
    %c112 = arith.constant 112 : index
    %25 = vector.load %arg6[%c0_17, %c112] : memref<8x401xf32, #tpu.memory_space<vmem>>, vector<8x256xf32>
    %c1 = arith.constant 1 : index
    %c0_18 = arith.constant 0 : index
    %c0_19 = arith.constant 0 : index
    %26 = vector.load %arg2[%c1, %c0_18, %c0_19] : memref<9x8x1xf32, #tpu.memory_space<vmem>>, vector<1x8x1xf32>
    %27 = vector.shape_cast %26 : vector<1x8x1xf32> to vector<8x1xf32>
    %28 = vector.broadcast %27 : vector<8x1xf32> to vector<8x256xf32>
    %29 = arith.mulf %25, %28 : vector<8x256xf32>
    %c0_20 = arith.constant 0 : index
    %c128_21 = arith.constant 128 : index
    %30 = vector.load %arg6[%c0_20, %c128_21] : memref<8x401xf32, #tpu.memory_space<vmem>>, vector<8x256xf32>
    %c4 = arith.constant 4 : index
    %c0_22 = arith.constant 0 : index
    %c0_23 = arith.constant 0 : index
    %31 = vector.load %arg2[%c4, %c0_22, %c0_23] : memref<9x8x1xf32, #tpu.memory_space<vmem>>, vector<1x8x1xf32>
    %32 = vector.shape_cast %31 : vector<1x8x1xf32> to vector<8x1xf32>
    %33 = vector.broadcast %32 : vector<8x1xf32> to vector<8x256xf32>
    %34 = arith.mulf %30, %33 : vector<8x256xf32>
    %35 = arith.addf %29, %34 : vector<8x256xf32>
    %c0_24 = arith.constant 0 : index
    %c144 = arith.constant 144 : index
    %36 = vector.load %arg6[%c0_24, %c144] : memref<8x401xf32, #tpu.memory_space<vmem>>, vector<8x256xf32>
    %c7 = arith.constant 7 : index
    %c0_25 = arith.constant 0 : index
    %c0_26 = arith.constant 0 : index
    %37 = vector.load %arg2[%c7, %c0_25, %c0_26] : memref<9x8x1xf32, #tpu.memory_space<vmem>>, vector<1x8x1xf32>
    %38 = vector.shape_cast %37 : vector<1x8x1xf32> to vector<8x1xf32>
    %39 = vector.broadcast %38 : vector<8x1xf32> to vector<8x256xf32>
    %40 = arith.mulf %36, %39 : vector<8x256xf32>
    %41 = arith.addf %35, %40 : vector<8x256xf32>
    %42 = arith.addf %24, %41 : vector<8x256xf32>
    %c0_27 = arith.constant 0 : index
    %c113 = arith.constant 113 : index
    %43 = vector.load %arg6[%c0_27, %c113] : memref<8x401xf32, #tpu.memory_space<vmem>>, vector<8x256xf32>
    %c2 = arith.constant 2 : index
    %c0_28 = arith.constant 0 : index
    %c0_29 = arith.constant 0 : index
    %44 = vector.load %arg2[%c2, %c0_28, %c0_29] : memref<9x8x1xf32, #tpu.memory_space<vmem>>, vector<1x8x1xf32>
    %45 = vector.shape_cast %44 : vector<1x8x1xf32> to vector<8x1xf32>
    %46 = vector.broadcast %45 : vector<8x1xf32> to vector<8x256xf32>
    %47 = arith.mulf %43, %46 : vector<8x256xf32>
    %c0_30 = arith.constant 0 : index
    %c129 = arith.constant 129 : index
    %48 = vector.load %arg6[%c0_30, %c129] : memref<8x401xf32, #tpu.memory_space<vmem>>, vector<8x256xf32>
    %c5 = arith.constant 5 : index
    %c0_31 = arith.constant 0 : index
    %c0_32 = arith.constant 0 : index
    %49 = vector.load %arg2[%c5, %c0_31, %c0_32] : memref<9x8x1xf32, #tpu.memory_space<vmem>>, vector<1x8x1xf32>
    %50 = vector.shape_cast %49 : vector<1x8x1xf32> to vector<8x1xf32>
    %51 = vector.broadcast %50 : vector<8x1xf32> to vector<8x256xf32>
    %52 = arith.mulf %48, %51 : vector<8x256xf32>
    %53 = arith.addf %47, %52 : vector<8x256xf32>
    %c0_33 = arith.constant 0 : index
    %c145 = arith.constant 145 : index
    %54 = vector.load %arg6[%c0_33, %c145] : memref<8x401xf32, #tpu.memory_space<vmem>>, vector<8x256xf32>
    %c8 = arith.constant 8 : index
    %c0_34 = arith.constant 0 : index
    %c0_35 = arith.constant 0 : index
    %55 = vector.load %arg2[%c8, %c0_34, %c0_35] : memref<9x8x1xf32, #tpu.memory_space<vmem>>, vector<1x8x1xf32>
    %56 = vector.shape_cast %55 : vector<1x8x1xf32> to vector<8x1xf32>
    %57 = vector.broadcast %56 : vector<8x1xf32> to vector<8x256xf32>
    %58 = arith.mulf %54, %57 : vector<8x256xf32>
    %59 = arith.addf %53, %58 : vector<8x256xf32>
    %c2_36 = arith.constant 2 : index
    %c0_37 = arith.constant 0 : index
    %60 = vector.load %arg3[%c2_36, %c0_37] : memref<3x256xf32, #tpu.memory_space<vmem>>, vector<1x256xf32>
    %61 = vector.broadcast %60 : vector<1x256xf32> to vector<8x256xf32>
    %62 = arith.mulf %59, %61 : vector<8x256xf32>
    %63 = arith.addf %42, %62 : vector<8x256xf32>
    %c0_38 = arith.constant 0 : index
    %c0_39 = arith.constant 0 : index
    %64 = vector.load %arg4[%c0_38, %c0_39] : memref<16x8xf32, #tpu.memory_space<vmem>>, vector<16x8xf32>
    %cst_40 = arith.constant dense<0.000000e+00> : vector<16x256xf32>
    %65 = tpu.matmul %64, %63, %cst_40 {dimension_numbers = #tpu.dot_dimension_numbers<[1], [0], [0], [1], [0, 0, 1, 1], [], []>} : vector<16x8xf32>, vector<8x256xf32>, vector<16x256xf32> -> vector<16x256xf32>
    %c0_41 = arith.constant 0 : index
    %c0_42 = arith.constant 0 : index
    %66 = vector.load %arg5[%c0_41, %c0_42] : memref<16x256xf32, #tpu.memory_space<vmem>>, vector<16x256xf32>
    tpu.vector_store %arg5[%c0_41, %c0_42], %65 {strides = array<i32>} : memref<16x256xf32, #tpu.memory_space<vmem>>, vector<16x256xf32>,
    return
  }
  func.func @transform_0(%arg0: i32) -> (i32, i32, i32) {
    %c0_i32 = arith.constant 0 : i32
    %c0_i32_0 = arith.constant 0 : i32
    %c0_i32_1 = arith.constant 0 : i32
    return %arg0, %c0_i32, %c0_i32_0 : i32, i32, i32
  }
  func.func @transform_1(%arg0: i32) -> (i32, i32, i32) {
    %c0_i32 = arith.constant 0 : i32
    %c0_i32_0 = arith.constant 0 : i32
    %c0_i32_1 = arith.constant 0 : i32
    %c0_i32_2 = arith.constant 0 : i32
    return %c0_i32, %c0_i32_0, %c0_i32_1 : i32, i32, i32
  }
  func.func @transform_2(%arg0: i32) -> (i32, i32) {
    %c0_i32 = arith.constant 0 : i32
    %c0_i32_0 = arith.constant 0 : i32
    %c0_i32_1 = arith.constant 0 : i32
    return %c0_i32, %c0_i32_0 : i32, i32
  }
  func.func @transform_3(%arg0: i32) -> (i32, i32) {
    %c0_i32 = arith.constant 0 : i32
    %c0_i32_0 = arith.constant 0 : i32
    %c0_i32_1 = arith.constant 0 : i32
    return %c0_i32, %c0_i32_0 : i32, i32
  }
  func.func @transform_4(%arg0: i32) -> (i32, i32) {
    %c0_i32 = arith.constant 0 : i32
    %c0_i32_0 = arith.constant 0 : i32
    return %arg0, %c0_i32 : i32, i32
  }
}

</mosaic_0001>

<llo_original>
// kernel: forward.1
$region0: #{forward.1}
  #allocation0 [shape = 'u32[]', space=smem, size = 0x4, offset = 0x4, fixed_abs, tag = 'smem constant byte address 0x4 - core index']
  #allocation1 [shape = 'u32[144,128]{1,0:T(1,128)}', space=vmem, size = 0x12000, scoped, tag = 'internal scratch']
  #allocation2 [shape = 'f32[8,401]{1,0:T(8,128)}', space=vmem, size = 0x4000, scoped, tag = 'scratch operand']
  %s0 = inlined_call_operand.vmem [shape: f32[1,8,256], index: 0, kind: input, shape index: {}]
  %s1 = inlined_call_operand.vmem [shape: f32[9,8,1], index: 1, kind: input, shape index: {}]
  %s2 = inlined_call_operand.vmem [shape: f32[3,256], index: 2, kind: input, shape index: {}]
  %s3 = inlined_call_operand.vmem [shape: f32[16,8], index: 3, kind: input, shape index: {}]
  %s4 = inlined_call_operand.vmem [shape: f32[16,256], index: 4, kind: output, shape index: {}]
  %s5 = sld [smem:[#allocation0]]
  $region26: #{forward.1} parent=0
    _
  %s7 = ssub.s32 1, %s5
  %s8 = scalar_select 0, %s7, %s5
  // Predicated region
  $region2: #{forward.1} parent=0 // pred_check
    _
  $region3: #{forward.1} parent=0 // pred_check_branch
    %10 = sbr.rel (0) target = $region5
  $region4: #{forward.1} parent=0 // pred_region
    _
  $region5: #{forward.1} parent=0 // pred_fallthru
    _
  // Predicated region
  $region6: #{forward.1} parent=0 // pred_check
    _
  $region7: #{forward.1} parent=0 // pred_check_branch
    %12 = sbr.rel (0) target = $region9
  $region8: #{forward.1} parent=0 // pred_region
    _
  $region9: #{forward.1} parent=0 // pred_fallthru
    _
  // Predicated region
  $region10: #{forward.1} parent=0 // pred_check
    _
  $region11: #{forward.1} parent=0 // pred_check_branch
    %14 = sbr.rel (0) target = $region13
  $region12: #{forward.1} parent=0 // pred_region
    _
  $region13: #{forward.1} parent=0 // pred_fallthru
    _
  // Predicated region
  $region14: #{forward.1} parent=0 // pred_check
    _
  $region15: #{forward.1} parent=0 // pred_check_branch
    %16 = sbr.rel (0) target = $region17
  $region16: #{forward.1} parent=0 // pred_region
    _
  $region17: #{forward.1} parent=0 // pred_fallthru
    _
  %17 = vst [vmem:[#allocation2] sm:$0xff] 0.0
  %18 = vst [vmem:[#allocation2 + $0x8] sm:$0xff] 0.0
  %19 = vst [vmem:[#allocation2 + $0x10] sm:$0xff] 0.0
  %vm20 = vcmask 138240
  %21 = vst.msk [vmem:[#allocation2 + $0x18] sm:$0xff] %vm20, 0.0
  %v22 = vld [vmem:[%s0] sm:$0xff]
  %v23 = vld [vmem:[%s0 + $0x8] sm:$0xff]
  %24 = vst [vmem:[#allocation2 + $0x8] sm:$0xff] %v22
  %25 = vst [vmem:[#allocation2 + $0x10] sm:$0xff] %v23
  %v26 = vld [vmem:[#allocation2] sm:$0xff]
  %v27 = vld [vmem:[#allocation2 + $0x8] sm:$0xff]
  %v28 = vld [vmem:[#allocation2 + $0x10] sm:$0xff]
  %v29 = vld [vmem:[%s1] sm:$0xff]
  %31 = vset.pattern.permute.xlu0 0
  %32 = vperm.xlu0 %31, %v29
  %v33 = vpop.permute.xlu0 %32
  %v35 = vmul.f32 %v26, %v33
  %v36 = vmul.f32 %v27, %v33
  %v37 = vmul.f32 %v28, %v33
  %s38 = scalar_lea.vmem %s1, 24
  %v39 = vld [vmem:[%s38] sm:$0xff]
  %41 = vset.pattern.permute.xlu0 0
  %42 = vperm.xlu0 %41, %v39
  %v43 = vpop.permute.xlu0 %42
  %v45 = vmul.f32 %v26, %v43
  %v46 = vmul.f32 %v27, %v43
  %v47 = vmul.f32 %v28, %v43
  %51 = vrot.lane.b32.xlu0 %v45, 112
  %v52 = vpop.permute.xlu0 %51
  %53 = vrot.lane.b32.xlu0 %v46, 112
  %v54 = vpop.permute.xlu0 %53
  %55 = vrot.lane.b32.xlu0 %v47, 112
  %v56 = vpop.permute.xlu0 %55
  %vm57 = vcmask 916480
  %v58 = vsel %vm57, %v52, %v54
  %v59 = vsel %vm57, %v54, %v56
  %v63 = vadd.f32 %v35, %v58
  %v64 = vadd.f32 %v36, %v59
  %v65 = vadd.f32 %v37, %v56
  %v66 = vld [vmem:[#allocation2 + $0x8] sm:$0xff]
  %v67 = vld [vmem:[#allocation2 + $0x10] sm:$0xff]
  %v68 = vld [vmem:[#allocation2 + $0x18] sm:$0xff]
  %s69 = scalar_lea.vmem %s1, 48
  %v70 = vld [vmem:[%s69] sm:$0xff]
  %72 = vset.pattern.permute.xlu0 0
  %73 = vperm.xlu0 %72, %v70
  %v74 = vpop.permute.xlu0 %73
  %v76 = vmul.f32 %v66, %v74
  %v77 = vmul.f32 %v67, %v74
  %v78 = vmul.f32 %v68, %v74
  %82 = vrot.lane.b32.xlu0 %v76, 96
  %v83 = vpop.permute.xlu0 %82
  %84 = vrot.lane.b32.xlu0 %v77, 96
  %v85 = vpop.permute.xlu0 %84
  %86 = vrot.lane.b32.xlu0 %v78, 96
  %v87 = vpop.permute.xlu0 %86
  %vm88 = vcmask 785408
  %v89 = vsel %vm88, %v83, %v85
  %v90 = vsel %vm88, %v85, %v87
  %v94 = vadd.f32 %v63, %v83
  %v95 = vadd.f32 %v64, %v89
  %v96 = vadd.f32 %v65, %v90
  %v97 = vld [vmem:[%s2] ss:$4 sm:$0x3]
  %v99 = vlaneseq
  %v100 = vshrl.u32 %v99, 7
  %v101 = vsub.s32 0, %v100
  %v102 = vrot.slane %v97, %v101
  %v103 = vlaneseq
  %v104 = vshrl.u32 %v103, 7
  %v105 = vsub.s32 1, %v104
  %v106 = vrot.slane %v97, %v105
  %107 = vrot.lane.b32.xlu0 %v102, 111
  %v108 = vpop.permute.xlu0 %107
  %109 = vrot.lane.b32.xlu0 %v106, 111
  %v110 = vpop.permute.xlu0 %109
  %vm111 = vcmask 908288
  %v112 = vsel %vm111, %v108, %v110
  %v116 = vmul.f32 %v94, %v108
  %v117 = vmul.f32 %v95, %v112
  %v118 = vmul.f32 %v96, %v110
  %s119 = scalar_lea.vmem %s1, 8
  %v120 = vld [vmem:[%s119] sm:$0xff]
  %122 = vset.pattern.permute.xlu0 0
  %123 = vperm.xlu0 %122, %v120
  %v124 = vpop.permute.xlu0 %123
  %v126 = vmul.f32 %v26, %v124
  %v127 = vmul.f32 %v27, %v124
  %v128 = vmul.f32 %v28, %v124
  %s129 = scalar_lea.vmem %s1, 32
  %v130 = vld [vmem:[%s129] sm:$0xff]
  %132 = vset.pattern.permute.xlu0 0
  %133 = vperm.xlu0 %132, %v130
  %v134 = vpop.permute.xlu0 %133
  %v136 = vmul.f32 %v27, %v134
  %v137 = vmul.f32 %v28, %v134
  %140 = vrot.lane.b32.xlu0 %v136, 112
  %v141 = vpop.permute.xlu0 %140
  %142 = vrot.lane.b32.xlu0 %v137, 112
  %v143 = vpop.permute.xlu0 %142
  %v144 = vsel %vm57, %v141, %v143
  %v148 = vadd.f32 %v126, %v141
  %v149 = vadd.f32 %v127, %v144
  %v150 = vadd.f32 %v128, %v143
  %s151 = scalar_lea.vmem %s1, 56
  %v152 = vld [vmem:[%s151] sm:$0xff]
  %154 = vset.pattern.permute.xlu0 0
  %155 = vperm.xlu0 %154, %v152
  %v156 = vpop.permute.xlu0 %155
  %v158 = vmul.f32 %v66, %v156
  %v159 = vmul.f32 %v67, %v156
  %v160 = vmul.f32 %v68, %v156
  %164 = vrot.lane.b32.xlu0 %v158, 96
  %v165 = vpop.permute.xlu0 %164
  %166 = vrot.lane.b32.xlu0 %v159, 96
  %v167 = vpop.permute.xlu0 %166
  %168 = vrot.lane.b32.xlu0 %v160, 96
  %v169 = vpop.permute.xlu0 %168
  %v170 = vsel %vm88, %v165, %v167
  %v171 = vsel %vm88, %v167, %v169
  %v175 = vadd.f32 %v148, %v165
  %v176 = vadd.f32 %v149, %v170
  %v177 = vadd.f32 %v150, %v171
  %181 = vrot.lane.b32.xlu0 %v175, 127
  %v182 = vpop.permute.xlu0 %181
  %183 = vrot.lane.b32.xlu0 %v176, 127
  %v184 = vpop.permute.xlu0 %183
  %185 = vrot.lane.b32.xlu0 %v177, 127
  %v186 = vpop.permute.xlu0 %185
  %vm187 = vcmask 1039360
  %v188 = vsel %vm187, %v182, %v184
  %v189 = vsel %vm187, %v184, %v186
  %v193 = vadd.f32 %v116, %v188
  %v194 = vadd.f32 %v117, %v189
  %v195 = vadd.f32 %v118, %v186
  %s196 = scalar_lea.vmem %s1, 16
  %v197 = vld [vmem:[%s196] sm:$0xff]
  %199 = vset.pattern.permute.xlu0 0
  %200 = vperm.xlu0 %199, %v197
  %v201 = vpop.permute.xlu0 %200
  %v203 = vmul.f32 %v26, %v201
  %v204 = vmul.f32 %v27, %v201
  %v205 = vmul.f32 %v28, %v201
  %s206 = scalar_lea.vmem %s1, 40
  %v207 = vld [vmem:[%s206] sm:$0xff]
  %209 = vset.pattern.permute.xlu0 0
  %210 = vperm.xlu0 %209, %v207
  %v211 = vpop.permute.xlu0 %210
  %v213 = vmul.f32 %v66, %v211
  %v214 = vmul.f32 %v67, %v211
  %v215 = vmul.f32 %v68, %v211
  %219 = vrot.lane.b32.xlu0 %v213, 112
  %v220 = vpop.permute.xlu0 %219
  %221 = vrot.lane.b32.xlu0 %v214, 112
  %v222 = vpop.permute.xlu0 %221
  %223 = vrot.lane.b32.xlu0 %v215, 112
  %v224 = vpop.permute.xlu0 %223
  %v225 = vsel %vm57, %v220, %v222
  %v226 = vsel %vm57, %v222, %v224
  %v230 = vadd.f32 %v203, %v220
  %v231 = vadd.f32 %v204, %v225
  %v232 = vadd.f32 %v205, %v226
  %s233 = scalar_lea.vmem %s1, 64
  %v234 = vld [vmem:[%s233] sm:$0xff]
  %236 = vset.pattern.permute.xlu0 0
  %237 = vperm.xlu0 %236, %v234
  %v238 = vpop.permute.xlu0 %237
  %v240 = vmul.f32 %v66, %v238
  %v241 = vmul.f32 %v67, %v238
  %v242 = vmul.f32 %v68, %v238
  %246 = vrot.lane.b32.xlu0 %v240, 96
  %v247 = vpop.permute.xlu0 %246
  %248 = vrot.lane.b32.xlu0 %v241, 96
  %v249 = vpop.permute.xlu0 %248
  %250 = vrot.lane.b32.xlu0 %v242, 96
  %v251 = vpop.permute.xlu0 %250
  %v252 = vsel %vm88, %v247, %v249
  %v253 = vsel %vm88, %v249, %v251
  %v257 = vadd.f32 %v230, %v247
  %v258 = vadd.f32 %v231, %v252
  %v259 = vadd.f32 %v232, %v253
  %s260 = scalar_lea.vmem %s2, 2
  %v261 = vld [vmem:[%s260] ss:$4 sm:$0x3]
  %v263 = vlaneseq
  %v264 = vshrl.u32 %v263, 7
  %v265 = vsub.s32 0, %v264
  %v266 = vrot.slane %v261, %v265
  %v267 = vlaneseq
  %v268 = vshrl.u32 %v267, 7
  %v269 = vsub.s32 1, %v268
  %v270 = vrot.slane %v261, %v269
  %271 = vrot.lane.b32.xlu0 %v266, 113
  %v272 = vpop.permute.xlu0 %271
  %273 = vrot.lane.b32.xlu0 %v270, 113
  %v274 = vpop.permute.xlu0 %273
  %vm275 = vcmask 924672
  %v276 = vsel %vm275, %v272, %v274
  %v280 = vmul.f32 %v257, %v272
  %v281 = vmul.f32 %v258, %v276
  %v282 = vmul.f32 %v259, %v274
  %286 = vrot.lane.b32.xlu0 %v280, 126
  %v287 = vpop.permute.xlu0 %286
  %288 = vrot.lane.b32.xlu0 %v281, 126
  %v289 = vpop.permute.xlu0 %288
  %290 = vrot.lane.b32.xlu0 %v282, 126
  %v291 = vpop.permute.xlu0 %290
  %vm292 = vcmask 1031168
  %v293 = vsel %vm292, %v287, %v289
  %v294 = vsel %vm292, %v289, %v291
  %v298 = vadd.f32 %v193, %v293
  %v299 = vadd.f32 %v194, %v294
  %v300 = vadd.f32 %v195, %v291
  %v301 = vld [vmem:[%s3] sm:$0xff]
  %v302 = vld [vmem:[%s3 + $0x8] sm:$0xff]
  %306 = vrot.lane.b32.xlu0 %v298, 17
  %v307 = vpop.permute.xlu0 %306
  %308 = vrot.lane.b32.xlu0 %v299, 17
  %v309 = vpop.permute.xlu0 %308
  %310 = vrot.lane.b32.xlu0 %v300, 17
  %v311 = vpop.permute.xlu0 %310
  %v312 = vsel %vm20, %v307, %v309
  %v313 = vsel %vm20, %v309, %v311
  %vm316 = vcmask 64512
  %v318 = vsel %vm316, %v301, 0
  %v321 = vsel %vm316, %v302, 0
  %323 = vmatprep.subr.mxu0 0.0
  %324 = vmatpush1.msra.mxu0 0.0
  %325 = vmatprep.subr.mxu0 0.0
  %326 = vmatpush1.msra.mxu0 0.0
  %327 = vmatprep.subr.mxu0 0.0
  %328 = vmatpush1.msra.mxu0 0.0
  %329 = vmatprep.subr.mxu0 0.0
  %330 = vmatpush1.msra.mxu0 0.0
  %331 = vmatprep.subr.mxu0 0.0
  %332 = vmatpush1.msra.mxu0 0.0
  %333 = vmatprep.subr.mxu0 0.0
  %334 = vmatpush1.msra.mxu0 0.0
  %335 = vmatprep.subr.mxu0 0.0
  %336 = vmatpush1.msra.mxu0 0.0
  %337 = vmatprep.subr.mxu0 0.0
  %338 = vmatpush1.msra.mxu0 0.0
  %339 = vmatprep.subr.mxu0 0.0
  %340 = vmatpush1.msra.mxu0 0.0
  %341 = vmatprep.subr.mxu0 0.0
  %342 = vmatpush1.msra.mxu0 0.0
  %343 = vmatprep.subr.mxu0 0.0
  %344 = vmatpush1.msra.mxu0 0.0
  %345 = vmatprep.subr.mxu0 0.0
  %346 = vmatpush1.msra.mxu0 0.0
  %347 = vmatprep.subr.mxu0 0.0
  %348 = vmatpush1.msra.mxu0 0.0
  %349 = vmatprep.subr.mxu0 0.0
  %350 = vmatpush1.msra.mxu0 0.0
  %351 = vmatprep.subr.mxu0 0.0
  %352 = vmatpush1.msra.mxu0 0.0
  %353 = vmatprep.subr.mxu0 %v313
  %354 = vmatpush1.msra.mxu0 %v312
  %355 = vmatprep.subr.mxu0 0.0
  %356 = vmatpush2.msra.mxu0 0.0
  %357 = vmatprep.subr.mxu0 0.0
  %358 = vmatpush2.msra.mxu0 0.0
  %359 = vmatprep.subr.mxu0 0.0
  %360 = vmatpush2.msra.mxu0 0.0
  %361 = vmatprep.subr.mxu0 0.0
  %362 = vmatpush2.msra.mxu0 0.0
  %363 = vmatprep.subr.mxu0 0.0
  %364 = vmatpush2.msra.mxu0 0.0
  %365 = vmatprep.subr.mxu0 0.0
  %366 = vmatpush2.msra.mxu0 0.0
  %367 = vmatprep.subr.mxu0 0.0
  %368 = vmatpush2.msra.mxu0 0.0
  %369 = vmatprep.subr.mxu0 0.0
  %370 = vmatpush2.msra.mxu0 0.0
  %371 = vmatprep.subr.mxu0 0.0
  %372 = vmatpush2.msra.mxu0 0.0
  %373 = vmatprep.subr.mxu0 0.0
  %374 = vmatpush2.msra.mxu0 0.0
  %375 = vmatprep.subr.mxu0 0.0
  %376 = vmatpush2.msra.mxu0 0.0
  %377 = vmatprep.subr.mxu0 0.0
  %378 = vmatpush2.msra.mxu0 0.0
  %379 = vmatprep.subr.mxu0 0.0
  %380 = vmatpush2.msra.mxu0 0.0
  %381 = vmatprep.subr.mxu0 0.0
  %382 = vmatpush2.msra.mxu0 0.0
  %383 = vmatprep.subr.mxu0 0.0
  %384 = vmatpush2.msra.mxu0 0.0
  %385 = vmatprep.subr.mxu0 0.0
  %386 = vmatpush2.msra.mxu0 0.0
  %387 = vmatprep.mubr.f32.mxu0 0.0
  %388 = vmatmul.mubr.f32.gmra.mxu0 %v318
  %v389 = vpop.f32.mrf.mxu0
  %v390 = vadd.f32 0.0, %v389
  %v391 = vpop.f32.mrf.mxu0
  %v392 = vadd.f32 0.0, %v391
  %393 = vmatprep.mubr.f32.mxu0 0.0
  %394 = vmatmul.mubr.f32.gmra.mxu0 %v321
  %v395 = vpop.f32.mrf.mxu0
  %v396 = vadd.f32 0.0, %v395
  %v397 = vpop.f32.mrf.mxu0
  %v398 = vadd.f32 0.0, %v397
  %399 = vdwg.mxu0
  %400 = vst [vmem:[%s4] sm:$0xff] %v390
  %401 = vst [vmem:[%s4 + $0x8] sm:$0xff] %v392
  %402 = vst [vmem:[%s4 + $0x10] sm:$0xff] %v396
  %403 = vst [vmem:[%s4 + $0x18] sm:$0xff] %v398
  // Predicated region
  $region18: #{forward.1} parent=0 // pred_check
    _
  $region19: #{forward.1} parent=0 // pred_check_branch
    %405 = sbr.rel (0) target = $region21
  $region20: #{forward.1} parent=0 // pred_region
    _
  $region21: #{forward.1} parent=0 // pred_fallthru
    _
  // Predicated region
  $region22: #{forward.1} parent=0 // pred_check
    _
  $region23: #{forward.1} parent=0 // pred_check_branch
    %407 = sbr.rel (0) target = $region25
  $region24: #{forward.1} parent=0 // pred_region
    _
  $region25: #{forward.1} parent=0 // pred_fallthru
    _

</llo_original>
